<compile_context>
chip_gen: v7x
topology: tpu7x:2x2x1
jax: 0.10.0
libtpu: 0.0.40
codegen_flags: <defaults>
</compile_context>

<pallas_src>
import functools

import jax
import jax.numpy as jnp
from jax.experimental import pallas as pl
from jax.experimental.pallas import tpu as pltpu


def _round_up(x, m):
    return (x + m - 1) // m * m


def _disc_block_kernel(p_ref, w_ref, o_ref, *, hw_valid):
    # p_ref: (1, K_pad, HWo_pad)   im2col patches for one batch element
    # w_ref: (Cout_pad, K_pad)     flattened conv weights
    # o_ref: (1, Cout_pad, HWo_pad)
    p = p_ref[0]                      # (K_pad, HWo_pad)
    w = w_ref[...]                    # (Cout_pad, K_pad)

    # Conv as a single MXU matmul, f32 accumulation, HWo on the lane axis.
    y = jnp.dot(w, p, preferred_element_type=jnp.float32)      # (Cout_pad, HWo_pad)

    # InstanceNorm2d (affine=False, eps=1e-5, biased variance) over the spatial
    # axis, one pass (sum / sum-of-squares).  Padded HWo columns of y are
    # exactly zero (zero patch columns, no bias), so plain lane reductions
    # divided by the valid spatial size are exact.
    inv_n = 1.0 / float(hw_valid)
    s = jnp.sum(y, axis=-1, keepdims=True)                      # (Cout_pad, 1)
    ss = jnp.sum(y * y, axis=-1, keepdims=True)
    mean = s * inv_n
    var = jnp.maximum(ss * inv_n - mean * mean, 0.0)
    y = (y - mean) * jax.lax.rsqrt(var + 1e-5)

    # LeakyReLU(0.2)
    o_ref[0] = jnp.where(y >= 0, y, 0.2 * y).astype(o_ref.dtype)


def disc_block_forward(x_nchw, weight, bias, stride, *, compute_dtype=jnp.bfloat16):
    """DiscBlock forward.  x_nchw: (N, C_in, H, W); weight: (C_out, C_in, 4, 4).

    `bias` is accepted for parity with the PyTorch module but is mathematically
    cancelled by the affine-free InstanceNorm that follows, so it is unused.
    """
    del bias
    N, C_in, H, W = x_nchw.shape
    C_out = weight.shape[0]
    KH = KW = 4
    H_out = (H + 2 - KH) // stride + 1
    W_out = (W + 2 - KW) // stride + 1
    HWo = H_out * W_out
    K = KH * KW * C_in

    # Padded sizes: HWo is the lane dim (multiple of 128); K / C_out are
    # sublane dims (multiple of 16 covers both f32 and bf16 packing).
    HWo_p = _round_up(HWo, 128)
    K_p = _round_up(K, 16)
    Cout_p = _round_up(C_out, 16)

    # Glue in plain JAX: reflect pad + im2col, built directly in NCHW so the
    # patch matrix is (K, HWo) (lane-dense spatial axis) with no NHWC passes.
    # TODO(synk): build the 16 shifted views in-kernel with strided pl.ds on the
    # padded input (removes the 4-16x im2col HBM inflation); that needs spatial
    # tiling + a two-pass IN reduction for large images, out of scope here.
    xp = jnp.pad(x_nchw, ((0, 0), (0, 0), (1, 1), (1, 1)), mode="reflect")
    cols = []
    for kh in range(KH):
        for kw in range(KW):
            sl = xp[:, :, kh:kh + stride * H_out:stride,
                          kw:kw + stride * W_out:stride]        # (N, Cin, Ho, Wo)
            cols.append(sl.reshape(N, C_in, HWo))
    patches = jnp.concatenate(cols, axis=1)                     # (N, K, HWo)
    patches = jnp.pad(patches, ((0, 0), (0, K_p - K), (0, HWo_p - HWo)))
    patches = patches.astype(compute_dtype)

    # Weight (Cout, Cin, KH, KW) -> (Cout, K) with row order (kh, kw, cin),
    # matching the im2col concatenation order above.
    w_mat = jnp.transpose(weight, (0, 2, 3, 1)).reshape(C_out, K)
    w_mat = jnp.pad(w_mat, ((0, Cout_p - C_out), (0, K_p - K))).astype(compute_dtype)

    kernel = functools.partial(_disc_block_kernel, hw_valid=HWo)
    out = pl.pallas_call(
        kernel,
        out_shape=jax.ShapeDtypeStruct((N, Cout_p, HWo_p), jnp.float32),
        grid_spec=pltpu.PrefetchScalarGridSpec(
            num_scalar_prefetch=0,
            grid=(N,),
            in_specs=[
                pl.BlockSpec((1, K_p, HWo_p), lambda n: (n, 0, 0)),
                pl.BlockSpec((Cout_p, K_p), lambda n: (0, 0)),
            ],
            out_specs=pl.BlockSpec((1, Cout_p, HWo_p), lambda n: (n, 0, 0)),
        ),
        compiler_params=pltpu.CompilerParams(
            dimension_semantics=("parallel",)),
    )(patches, w_mat)

    # Slice off padding; layout is already NCHW -> just reshape, no transpose.
    return out[:, :C_out, :HWo].reshape(N, C_out, H_out, W_out)


def _reference(x_nchw, weight, bias, stride):
    # Pure-JAX f32 reference of the PyTorch DiscBlock forward (with bias, to
    # confirm the bias really cancels under the affine-free InstanceNorm).
    x = jnp.pad(x_nchw, ((0, 0), (0, 0), (1, 1), (1, 1)), mode="reflect")
    y = jax.lax.conv_general_dilated(
        x, weight, (stride, stride), "VALID",
        dimension_numbers=("NCHW", "OIHW", "NCHW"))
    y = y + bias.reshape(1, -1, 1, 1)
    mean = y.mean(axis=(2, 3), keepdims=True)
    var = ((y - mean) ** 2).mean(axis=(2, 3), keepdims=True)
    y = (y - mean) / jnp.sqrt(var + 1e-5)
    return jnp.where(y >= 0, y, 0.2 * y)


if __name__ == "__main__":
    key = jax.random.PRNGKey(0)
    kx, kw, kb = jax.random.split(key, 3)

    N, C_in, H, W = 2, 4, 16, 16
    C_out, stride = 8, 2

    x = jax.random.normal(kx, (N, C_in, H, W), dtype=jnp.float32)
    # Deterministic synthetic parameters (Conv2d(4->8, k=4, bias=True) shapes).
    weight = jax.random.normal(kw, (C_out, C_in, 4, 4), dtype=jnp.float32) * 0.1
    bias = jax.random.normal(kb, (C_out,), dtype=jnp.float32) * 0.1

    ref = jax.block_until_ready(_reference(x, weight, bias, stride))

    # f32 path: tight check (also verifies the bias cancellation is exact).
    out_f32 = jax.block_until_ready(
        disc_block_forward(x, weight, bias, stride, compute_dtype=jnp.float32))
    assert out_f32.shape == ref.shape, (out_f32.shape, ref.shape)
    assert jnp.allclose(out_f32, ref, atol=1e-3, rtol=1e-3), \
        float(jnp.max(jnp.abs(out_f32 - ref)))

    # Default bf16-matmul path (f32 accumulation + f32 norm statistics).
    out = jax.block_until_ready(disc_block_forward(x, weight, bias, stride))
    assert out.shape == ref.shape, (out.shape, ref.shape)
    assert jnp.allclose(out, ref, atol=5e-2, rtol=5e-2), \
        float(jnp.max(jnp.abs(out - ref)))

    print("KERNEL_OK")
</pallas_src>

<mosaic_0001>
module attributes {stable_mosaic.version = 11 : i64} {
  func.func @_disc_block_kernel(%arg0: i32, %arg1: memref<1x64x128xf32, #tpu.memory_space<vmem>>, %arg2: memref<16x64xf32, #tpu.memory_space<vmem>>, %arg3: memref<1x16x128xf32, #tpu.memory_space<vmem>>) attributes {dimension_semantics = [#tpu.dimension_semantics<parallel>], iteration_bounds = array<i64: 2>, scalar_prefetch = 0 : i64, scratch_operands = 0 : i64, tpu.core_type = #tpu.core_type<tc>, window_params = [{transform_indices = @transform_0, window_bounds = array<i64: 1, 64, 128>}, {pipeline_mode = #tpu.pipeline_mode<synchronous>, transform_indices = @transform_1, window_bounds = array<i64: 16, 64>}, {transform_indices = @transform_2, window_bounds = array<i64: 1, 16, 128>}]} {
    %c0 = arith.constant 0 : index
    %c0_0 = arith.constant 0 : index
    %c0_1 = arith.constant 0 : index
    %0 = vector.load %arg1[%c0, %c0_0, %c0_1] : memref<1x64x128xf32, #tpu.memory_space<vmem>>, vector<1x64x128xf32>
    %1 = vector.shape_cast %0 : vector<1x64x128xf32> to vector<64x128xf32>
    %c0_2 = arith.constant 0 : index
    %c0_3 = arith.constant 0 : index
    %2 = vector.load %arg2[%c0_2, %c0_3] : memref<16x64xf32, #tpu.memory_space<vmem>>, vector<16x64xf32>
    %cst = arith.constant dense<0.000000e+00> : vector<16x128xf32>
    %3 = tpu.matmul %2, %1, %cst {dimension_numbers = #tpu.dot_dimension_numbers<[1], [0], [0], [1], [0, 0, 1, 1], [], []>} : vector<16x64xf32>, vector<64x128xf32>, vector<16x128xf32> -> vector<16x128xf32>
    %cst_4 = arith.constant dense<0.000000e+00> : vector<16xf32>
    %4 = vector.multi_reduction <add>, %3, %cst_4 [1] : vector<16x128xf32> to vector<16xf32>
    %5 = vector.shape_cast %4 : vector<16xf32> to vector<16x1xf32>
    %6 = arith.mulf %3, %3 : vector<16x128xf32>
    %cst_5 = arith.constant dense<0.000000e+00> : vector<16xf32>
    %7 = vector.multi_reduction <add>, %6, %cst_5 [1] : vector<16x128xf32> to vector<16xf32>
    %8 = vector.shape_cast %7 : vector<16xf32> to vector<16x1xf32>
    %cst_6 = arith.constant 1.562500e-02 : f32
    %9 = vector.broadcast %cst_6 : f32 to vector<16x1xf32>
    %10 = arith.mulf %5, %9 : vector<16x1xf32>
    %cst_7 = arith.constant 1.562500e-02 : f32
    %11 = vector.broadcast %cst_7 : f32 to vector<16x1xf32>
    %12 = arith.mulf %8, %11 : vector<16x1xf32>
    %13 = arith.mulf %10, %10 : vector<16x1xf32>
    %14 = arith.subf %12, %13 : vector<16x1xf32>
    %cst_8 = arith.constant 0.000000e+00 : f32
    %15 = vector.broadcast %cst_8 : f32 to vector<16x1xf32>
    %16 = arith.maximumf %14, %15 : vector<16x1xf32>
    %17 = vector.broadcast %10 : vector<16x1xf32> to vector<16x128xf32>
    %18 = arith.subf %3, %17 : vector<16x128xf32>
    %cst_9 = arith.constant 9.99999974E-6 : f32
    %19 = vector.broadcast %cst_9 : f32 to vector<16x1xf32>
    %20 = arith.addf %16, %19 : vector<16x1xf32>
    %21 = math.rsqrt %20 : vector<16x1xf32>
    %22 = vector.broadcast %21 : vector<16x1xf32> to vector<16x128xf32>
    %23 = arith.mulf %18, %22 : vector<16x128xf32>
    %cst_10 = arith.constant 0.000000e+00 : f32
    %24 = vector.broadcast %cst_10 : f32 to vector<16x128xf32>
    %25 = arith.cmpf oge, %23, %24 : vector<16x128xf32>
    %cst_11 = arith.constant 2.000000e-01 : f32
    %26 = vector.broadcast %cst_11 : f32 to vector<16x128xf32>
    %27 = arith.mulf %26, %23 : vector<16x128xf32>
    %28 = arith.select %25, %23, %27 : vector<16x128xi1>, vector<16x128xf32>
    %c0_12 = arith.constant 0 : index
    %c0_13 = arith.constant 0 : index
    %c0_14 = arith.constant 0 : index
    %29 = vector.load %arg3[%c0_12, %c0_13, %c0_14] : memref<1x16x128xf32, #tpu.memory_space<vmem>>, vector<1x16x128xf32>
    %30 = vector.shape_cast %29 : vector<1x16x128xf32> to vector<16x128xf32>
    %31 = vector.shape_cast %28 : vector<16x128xf32> to vector<1x16x128xf32>
    tpu.vector_store %arg3[%c0_12, %c0_13, %c0_14], %31 {strides = array<i32>} : memref<1x16x128xf32, #tpu.memory_space<vmem>>, vector<1x16x128xf32>,
    return
  }
  func.func @transform_0(%arg0: i32) -> (i32, i32, i32) {
    %c0_i32 = arith.constant 0 : i32
    %c0_i32_0 = arith.constant 0 : i32
    %c0_i32_1 = arith.constant 0 : i32
    return %arg0, %c0_i32, %c0_i32_0 : i32, i32, i32
  }
  func.func @transform_1(%arg0: i32) -> (i32, i32) {
    %c0_i32 = arith.constant 0 : i32
    %c0_i32_0 = arith.constant 0 : i32
    %c0_i32_1 = arith.constant 0 : i32
    return %c0_i32, %c0_i32_0 : i32, i32
  }
  func.func @transform_2(%arg0: i32) -> (i32, i32, i32) {
    %c0_i32 = arith.constant 0 : i32
    %c0_i32_0 = arith.constant 0 : i32
    %c0_i32_1 = arith.constant 0 : i32
    return %arg0, %c0_i32, %c0_i32_0 : i32, i32, i32
  }
}

</mosaic_0001>

<llo_original>
// kernel: tpu_custom_call.1
$region0: #{tpu_custom_call.1}
  #allocation0 [shape = 'u32[]', space=smem, size = 0x4, offset = 0x4, fixed_abs, tag = 'smem constant byte address 0x4 - core index']
  #allocation1 [shape = 'u32[144,128]{1,0:T(1,128)}', space=vmem, size = 0x12000, scoped, tag = 'internal scratch']
  %s0 = inlined_call_operand.hbm [shape: f32[2,64,128], index: 0, kind: input, shape index: {}]
  %s1 = inlined_call_operand.hbm [shape: f32[16,64], index: 1, kind: input, shape index: {}]
  %s2 = inlined_call_operand.hbm [shape: f32[2,16,128], index: 2, kind: output, shape index: {}]
  %s3 = sld [smem:[#allocation0]]
  $region49: #{tpu_custom_call.1} parent=0
    _
  %s5 = ssub.s32 1, %s3
  %s6 = scalar_select 0, %s5, %s3
  $region1: #{tpu_custom_call.1} parent=0
    #allocation2 [shape = 'u8[65536]{0}', space=vmem, size = 0x10000, scoped, tag = 'input window, operand 0']
    #allocation3 [shape = 's32[2]{0}', space=sflag, size = 0x8, scoped, tag = 'scoped memory for tpu_custom_call.1']
    #allocation4 [shape = 's32[2]{0}', space=sflag, size = 0x8, scoped, tag = 'scoped memory for tpu_custom_call.1']
    #allocation5 [shape = 'u8[8192]{0}', space=vmem, size = 0x2000, scoped, tag = 'input window, operand 1, single buffered']
    #allocation6 [shape = 's32[1]{0}', space=sflag, size = 0x4, scoped, tag = 'scoped memory for tpu_custom_call.1']
    #allocation7 [shape = 'u8[16384]{0}', space=vmem, size = 0x4000, scoped, tag = 'output window, operand 0']
    %7 = vsyncpa [#allocation3], 0
    %s8 = scalar_lea.sflag [#allocation3], 1
    %9 = vsyncpa %s8, 0
    %10 = vsyncpa [#allocation6], 0
    %11 = vsyncpa [#allocation4], 0
    %s12 = scalar_lea.sflag [#allocation4], 1
    %13 = vsyncpa %s12, 0
    loop: start=0, step=1, limit=4
    $region2: #{tpu_custom_call.1} parent=1 // loop_pre_header
      _
    $region3: #{tpu_custom_call.1} parent=1 // loop_header
      %s15 = sphi 0, %s19
      %p16 = scmp.ge.s32.totalorder %s15, 4
      %s25 = sphi 0, %s27
      %s28 = sphi 0, %s25
      %s29 = sphi 0, %s28
      %s45 = sphi 0, %s29
      %s49 = sphi 0, %s49
      %s51 = sphi 0, %s49
      %s52 = sphi 0, %s51
      %s66 = sphi 0, %s52
      %s72 = sphi 0, %s74
      %s75 = sphi 0, %s72
      %s76 = sphi 0, %s75
      %s92 = sphi 0, %s76
    $region4: #{tpu_custom_call.1} parent=1 // loop_header_branch
      %18 = sbr.rel (%p16) target = $region8
    $region5: #{tpu_custom_call.1} parent=1 // loop_body
      %s20 = ssub.s32 %s15, 1
      %s21 = ssub.s32 %s15, 2
      %s22 = sadd.s32 %s15, 1
      %s23 = ssub.s32 %s15, %s22
      %p24 = scmp.eq.s32.totalorder %s23, 0
      %s26 = sadd.s32 %s25, 1
      %s27 = scalar_select %p24, %s25, %s26
      %p30 = pneg %p24
      %p31 = scmp.eq.s32.totalorder %s15, 1
      %p32 = por %p30, %p31
      %p33 = scmp.ne.s32.totalorder %s25, %s28
      %p34 = scmp.eq.s32.totalorder %s15, 0
      %p35 = por %p33, %p34
      %p36 = scmp.ne.s32.totalorder %s25, %s28
      %p37 = scmp.eq.s32.totalorder %s20, 1
      %p38 = por %p36, %p37
      %p39 = scmp.ne.s32.totalorder %s28, %s29
      %p40 = scmp.eq.s32.totalorder %s20, 0
      %p41 = por %p39, %p40
      %p42 = scmp.ne.s32.totalorder %s28, %s29
      %p43 = scmp.eq.s32.totalorder %s21, 1
      %p44 = por %p42, %p43
      %p46 = scmp.ne.s32.totalorder %s29, %s45
      %p47 = scmp.eq.s32.totalorder %s21, 0
      %p48 = por %p46, %p47
      %s50 = sadd.s32 %s49, 1
      %p53 = scmp.eq.s32.totalorder %s15, 1
      %p54 = scmp.ne.s32.totalorder %s49, %s51
      %p55 = scmp.eq.s32.totalorder %s15, 0
      %p56 = por %p54, %p55
      %p57 = scmp.ne.s32.totalorder %s49, %s51
      %p58 = scmp.eq.s32.totalorder %s20, 1
      %p59 = por %p57, %p58
      %p60 = scmp.ne.s32.totalorder %s51, %s52
      %p61 = scmp.eq.s32.totalorder %s20, 0
      %p62 = por %p60, %p61
      %p63 = scmp.ne.s32.totalorder %s51, %s52
      %p64 = scmp.eq.s32.totalorder %s21, 1
      %p65 = por %p63, %p64
      %p67 = scmp.ne.s32.totalorder %s52, %s66
      %p68 = scmp.eq.s32.totalorder %s21, 0
      %p69 = por %p67, %p68
      %s70 = ssub.s32 %s15, %s22
      %p71 = scmp.eq.s32.totalorder %s70, 0
      %s73 = sadd.s32 %s72, 1
      %s74 = scalar_select %p71, %s72, %s73
      %p77 = pneg %p71
      %p78 = scmp.eq.s32.totalorder %s15, 1
      %p79 = por %p77, %p78
      %p80 = scmp.ne.s32.totalorder %s72, %s75
      %p81 = scmp.eq.s32.totalorder %s15, 0
      %p82 = por %p80, %p81
      %p83 = scmp.ne.s32.totalorder %s72, %s75
      %p84 = scmp.eq.s32.totalorder %s20, 1
      %p85 = por %p83, %p84
      %p86 = scmp.ne.s32.totalorder %s75, %s76
      %p87 = scmp.eq.s32.totalorder %s20, 0
      %p88 = por %p86, %p87
      %p89 = scmp.ne.s32.totalorder %s75, %s76
      %p90 = scmp.eq.s32.totalorder %s21, 1
      %p91 = por %p89, %p90
      %p93 = scmp.ne.s32.totalorder %s76, %s92
      %p94 = scmp.eq.s32.totalorder %s21, 0
      %p95 = por %p93, %p94
      %p96 = scmp.le.s32.totalorder 1, %s15
      %p97 = scmp.lt.s32.totalorder %s15, 3
      %p98 = pnand %p96, %p97
      %p99 = pneg %p98
      // Predicated region
      $region9: #{tpu_custom_call.1} parent=5 // pred_check
        _
      $region10: #{tpu_custom_call.1} parent=5 // pred_check_branch
        %101 = sbr.rel (%p98) target = $region12
      $region11: #{tpu_custom_call.1} parent=5 // pred_region
        %s102 = ssub.s32 %s15, 1
        // Predicated region
        $region13: #{tpu_custom_call.1} parent=11 // pred_check
          %p103 = pneg %p62
        $region14: #{tpu_custom_call.1} parent=11 // pred_check_branch
          %105 = sbr.rel (%p103) target = $region16
        $region15: #{tpu_custom_call.1} parent=11 // pred_region
          %s107 = ssub.s32 256, 256
          %108 = vsyncadd [#allocation6], %s107
          %s109 = sshll.u32 [#allocation5], 4
          %s110 = int_to_ptr.vmem [resolvable:$true] %s109
          %115 = dma.hbm_to_vmem [thread:$0]  %s1, 256, %s110, [#allocation6], 128, 128, 8
        $region16: #{tpu_custom_call.1} parent=11 // pred_fallthru
          _
      $region12: #{tpu_custom_call.1} parent=5 // pred_fallthru
        _
      %p116 = scmp.lt.s32.totalorder %s15, 2
      // Predicated region
      $region17: #{tpu_custom_call.1} parent=5 // pred_check
        %p117 = pneg %p116
      $region18: #{tpu_custom_call.1} parent=5 // pred_check_branch
        %119 = sbr.rel (%p117) target = $region20
      $region19: #{tpu_custom_call.1} parent=5 // pred_region
        // Predicated region
        $region21: #{tpu_custom_call.1} parent=19 // pred_check
          %p120 = pneg %p35
        $region22: #{tpu_custom_call.1} parent=19 // pred_check_branch
          %122 = sbr.rel (%p120) target = $region24
        $region23: #{tpu_custom_call.1} parent=19 // pred_region
          %s123 = sand.u32 %s25, 1
          %s124 = scalar_lea.sflag [#allocation3], %s123
          %s125 = sand.u32 %s25, 1
          %s126 = smul.addr %s125, 64
          %s127 = scalar_lea.vmem [#allocation2], %s126
          %s129 = ssub.s32 1024, 1024
          %130 = vsyncadd %s124, %s129
          %s131 = smul.addr %s15, 8
          %s132 = smul.addr %s131, 128
          %s133 = scalar_lea.hbm %s0, %s132
          %s134 = sshll.u32 %s127, 4
          %s135 = int_to_ptr.vmem [resolvable:$true] %s134
          %140 = dma.hbm_to_vmem [thread:$0]  %s133, 1024, %s135, %s124, 128, 128, 8
        $region24: #{tpu_custom_call.1} parent=19 // pred_fallthru
          _
      $region20: #{tpu_custom_call.1} parent=5 // pred_fallthru
        _
      %p141 = scmp.le.s32.totalorder 1, %s15
      %p142 = scmp.lt.s32.totalorder %s15, 3
      %p143 = pnand %p141, %p142
      %p144 = pneg %p143
      // Predicated region
      $region25: #{tpu_custom_call.1} parent=5 // pred_check
        _
      $region26: #{tpu_custom_call.1} parent=5 // pred_check_branch
        %146 = sbr.rel (%p143) target = $region28
      $region27: #{tpu_custom_call.1} parent=5 // pred_region
        %s147 = ssub.s32 %s15, 1
        %s148 = sand.u32 %s28, 1
        %s149 = scalar_lea.sflag [#allocation3], %s148
        %s150 = sand.u32 %s28, 1
        %s151 = smul.addr %s150, 64
        %s152 = scalar_lea.vmem [#allocation2], %s151
        // Predicated region
        $region29: #{tpu_custom_call.1} parent=27 // pred_check
          %p153 = pneg %p41
        $region30: #{tpu_custom_call.1} parent=27 // pred_check_branch
          %155 = sbr.rel (%p153) target = $region32
        $region31: #{tpu_custom_call.1} parent=27 // pred_region
          %156 = dma.done %s149, 1024
        $region32: #{tpu_custom_call.1} parent=27 // pred_fallthru
          _
        // Predicated region
        $region33: #{tpu_custom_call.1} parent=27 // pred_check
          %p157 = pneg %p62
        $region34: #{tpu_custom_call.1} parent=27 // pred_check_branch
          %159 = sbr.rel (%p157) target = $region36
        $region35: #{tpu_custom_call.1} parent=27 // pred_region
          %160 = dma.done [#allocation6], 256
        $region36: #{tpu_custom_call.1} parent=27 // pred_fallthru
          _
        %s161 = sand.u32 %s28, 1
        %s162 = scalar_lea.sflag [#allocation3], %s161
        %s163 = sand.u32 %s28, 1
        %s164 = smul.addr %s163, 64
        %s165 = scalar_lea.vmem [#allocation2], %s164
        %p166 = pneg %p41
        %p167 = pneg %p38
        %p168 = pneg %p62
        %p169 = pneg %p59
        %p170 = pneg %p88
        %p171 = pneg %p85
        %s172 = sand.u32 %s75, 1
        %s173 = scalar_lea.sflag [#allocation4], %s172
        %s174 = sand.u32 %s75, 1
        %s175 = smul.addr %s174, 16
        %s176 = scalar_lea.vmem [#allocation7], %s175
        %v177 = vld [vmem:[%s152] sm:$0xff]
        %v178 = vld [vmem:[%s152 + $0x8] sm:$0xff]
        %v179 = vld [vmem:[%s152 + $0x10] sm:$0xff]
        %v180 = vld [vmem:[%s152 + $0x18] sm:$0xff]
        %v181 = vld [vmem:[%s152 + $0x20] sm:$0xff]
        %v182 = vld [vmem:[%s152 + $0x28] sm:$0xff]
        %v183 = vld [vmem:[%s152 + $0x30] sm:$0xff]
        %v184 = vld [vmem:[%s152 + $0x38] sm:$0xff]
        %v185 = vld [vmem:[#allocation5] sm:$0xff]
        %v186 = vld [vmem:[#allocation5 + $0x8] sm:$0xff]
        %vm187 = vcmask 523264
        %v189 = vsel %vm187, %v185, 0
        %v192 = vsel %vm187, %v186, 0
        %194 = vmatprep.subr.mxu0 0.0
        %195 = vmatpush1.msra.mxu0 %v177
        %196 = vmatprep.subr.mxu0 0.0
        %197 = vmatpush1.msra.mxu0 %v178
        %198 = vmatprep.subr.mxu0 0.0
        %199 = vmatpush1.msra.mxu0 %v179
        %200 = vmatprep.subr.mxu0 0.0
        %201 = vmatpush1.msra.mxu0 %v180
        %202 = vmatprep.subr.mxu0 0.0
        %203 = vmatpush1.msra.mxu0 %v181
        %204 = vmatprep.subr.mxu0 0.0
        %205 = vmatpush1.msra.mxu0 %v182
        %206 = vmatprep.subr.mxu0 0.0
        %207 = vmatpush1.msra.mxu0 %v183
        %208 = vmatprep.subr.mxu0 0.0
        %209 = vmatpush1.msra.mxu0 %v184
        %210 = vmatprep.subr.mxu0 0.0
        %211 = vmatpush1.msra.mxu0 0.0
        %212 = vmatprep.subr.mxu0 0.0
        %213 = vmatpush1.msra.mxu0 0.0
        %214 = vmatprep.subr.mxu0 0.0
        %215 = vmatpush1.msra.mxu0 0.0
        %216 = vmatprep.subr.mxu0 0.0
        %217 = vmatpush1.msra.mxu0 0.0
        %218 = vmatprep.subr.mxu0 0.0
        %219 = vmatpush1.msra.mxu0 0.0
        %220 = vmatprep.subr.mxu0 0.0
        %221 = vmatpush1.msra.mxu0 0.0
        %222 = vmatprep.subr.mxu0 0.0
        %223 = vmatpush1.msra.mxu0 0.0
        %224 = vmatprep.subr.mxu0 0.0
        %225 = vmatpush1.msra.mxu0 0.0
        %226 = vmatprep.subr.mxu0 0.0
        %227 = vmatpush1.msra.mxu0 0.0
        %228 = vmatprep.subr.mxu0 0.0
        %229 = vmatpush1.msra.mxu0 0.0
        %230 = vmatprep.subr.mxu0 0.0
        %231 = vmatpush1.msra.mxu0 0.0
        %232 = vmatprep.subr.mxu0 0.0
        %233 = vmatpush1.msra.mxu0 0.0
        %234 = vmatprep.subr.mxu0 0.0
        %235 = vmatpush1.msra.mxu0 0.0
        %236 = vmatprep.subr.mxu0 0.0
        %237 = vmatpush1.msra.mxu0 0.0
        %238 = vmatprep.subr.mxu0 0.0
        %239 = vmatpush1.msra.mxu0 0.0
        %240 = vmatprep.subr.mxu0 0.0
        %241 = vmatpush1.msra.mxu0 0.0
        %242 = vmatprep.subr.mxu0 0.0
        %243 = vmatpush1.msra.mxu0 0.0
        %244 = vmatprep.subr.mxu0 0.0
        %245 = vmatpush1.msra.mxu0 0.0
        %246 = vmatprep.subr.mxu0 0.0
        %247 = vmatpush1.msra.mxu0 0.0
        %248 = vmatprep.subr.mxu0 0.0
        %249 = vmatpush1.msra.mxu0 0.0
        %250 = vmatprep.subr.mxu0 0.0
        %251 = vmatpush1.msra.mxu0 0.0
        %252 = vmatprep.subr.mxu0 0.0
        %253 = vmatpush1.msra.mxu0 0.0
        %254 = vmatprep.subr.mxu0 0.0
        %255 = vmatpush1.msra.mxu0 0.0
        %256 = vmatprep.subr.mxu0 0.0
        %257 = vmatpush1.msra.mxu0 0.0
        %258 = vmatprep.mubr.f32.mxu0 0.0
        %259 = vmatmul.mubr.f32.gmra.mrb[0].mxu0 %v189
        %v260 = vpop.f32.mrb[0].mxu0
        %v261 = vadd.f32 0.0, %v260
        %v262 = vpop.f32.mrb[0].mxu0
        %263 = vmatprep.mubr.f32.mxu0 0.0
        %264 = vmatmul.mubr.f32.gmra.mrb[0].mxu0 %v192
        %v265 = vpop.f32.mrb[0].mxu0
        %v266 = vadd.f32 0.0, %v265
        %v267 = vpop.f32.mrb[0].mxu0
        %268 = vdwg.mxu0
        %269 = vadd.xlane.f32.xlu0 %v261
        %v270 = vpop.xlane.xlu0 %269
        %271 = vadd.xlane.f32.xlu0 %v266
        %v272 = vpop.xlane.xlu0 %271
        %v273 = vmul.f32 %v261, %v261
        %v274 = vmul.f32 %v266, %v266
        %275 = vadd.xlane.f32.xlu0 %v273
        %v276 = vpop.xlane.xlu0 %275
        %277 = vadd.xlane.f32.xlu0 %v274
        %v278 = vpop.xlane.xlu0 %277
        %v279 = vmul.f32 %v270, 0.015625
        %v280 = vmul.f32 %v272, 0.015625
        %v281 = vmul.f32 %v276, 0.015625
        %v282 = vmul.f32 %v278, 0.015625
        %v283 = vmul.f32 %v279, %v279
        %v284 = vmul.f32 %v280, %v280
        %v285 = vsub.f32 %v281, %v283
        %v286 = vsub.f32 %v282, %v284
        %v287 = vmax.f32 %v285, 0.0
        %v288 = vmax.f32 %v286, 0.0
        %v289 = vsub.f32 %v261, %v279
        %v290 = vsub.f32 %v266, %v280
        %v291 = vadd.f32 %v287, 1e-05
        %v292 = vadd.f32 %v288, 1e-05
        %v293 = vrsqrt.pop %v291
        %v294 = vrsqrt.pop %v292
        %v295 = vmul.f32 %v289, %v293
        %v296 = vmul.f32 %v290, %v294
        %vm297 = vcmp.ge.f32.partialorder %v295, 0.0
        %vm298 = vcmp.ge.f32.partialorder %v296, 0.0
        %v299 = vmul.f32 %v295, 0.2
        %v300 = vmul.f32 %v296, 0.2
        %v301 = vsel %vm297, %v295, %v299
        %v302 = vsel %vm298, %v296, %v300
        %303 = vst [vmem:[%s176] sm:$0xff] %v301
        %304 = vst [vmem:[%s176 + $0x8] sm:$0xff] %v302
        %s305 = sand.u32 %s75, 1
        %s306 = scalar_lea.sflag [#allocation4], %s305
        %s307 = sand.u32 %s75, 1
        %s308 = smul.addr %s307, 16
        %s309 = scalar_lea.vmem [#allocation7], %s308
        // Predicated region
        $region37: #{tpu_custom_call.1} parent=27 // pred_check
          %p310 = pneg %p85
        $region38: #{tpu_custom_call.1} parent=27 // pred_check_branch
          %312 = sbr.rel (%p310) target = $region40
        $region39: #{tpu_custom_call.1} parent=27 // pred_region
          %s314 = ssub.s32 256, 256
          %315 = vsyncadd %s306, %s314
          %s316 = smul.addr %s20, 2
          %s317 = smul.addr %s316, 128
          %s318 = scalar_lea.hbm %s2, %s317
          %s319 = sshll.u32 %s309, 4
          %s320 = int_to_ptr.vmem [resolvable:$true] %s319
          %325 = dma.vmem_to_hbm [thread:$0]  %s320, 256, %s318, %s306, 128, 128, 8
        $region40: #{tpu_custom_call.1} parent=27 // pred_fallthru
          _
      $region28: #{tpu_custom_call.1} parent=5 // pred_fallthru
        _
      %p326 = scmp.le.s32.totalorder 2, %s15
      // Predicated region
      $region41: #{tpu_custom_call.1} parent=5 // pred_check
        %p327 = pneg %p326
      $region42: #{tpu_custom_call.1} parent=5 // pred_check_branch
        %329 = sbr.rel (%p327) target = $region44
      $region43: #{tpu_custom_call.1} parent=5 // pred_region
        %s330 = ssub.s32 %s15, 2
        // Predicated region
        $region45: #{tpu_custom_call.1} parent=43 // pred_check
          %p331 = pneg %p91
        $region46: #{tpu_custom_call.1} parent=43 // pred_check_branch
          %333 = sbr.rel (%p331) target = $region48
        $region47: #{tpu_custom_call.1} parent=43 // pred_region
          %s334 = sand.u32 %s76, 1
          %s335 = scalar_lea.sflag [#allocation4], %s334
          %s336 = sand.u32 %s76, 1
          %s337 = smul.addr %s336, 16
          %s338 = scalar_lea.vmem [#allocation7], %s337
          %339 = dma.done %s335, 256
        $region48: #{tpu_custom_call.1} parent=43 // pred_fallthru
          _
      $region44: #{tpu_custom_call.1} parent=5 // pred_fallthru
        _
    $region6: #{tpu_custom_call.1} parent=1 // loop_footer
      %s19 = sadd.s32 1, %s15
    $region7: #{tpu_custom_call.1} parent=1 // loop_footer_branch
      %14 = sbr.rel target = $region3
    $region8: #{tpu_custom_call.1} parent=1 // loop_exit
      _
    %340 = vsyncpa [#allocation3], 1
    %s341 = scalar_lea.sflag [#allocation3], 1
    %342 = vsyncpa %s341, 1
    %343 = vsyncpa [#allocation6], 1
    %344 = vsyncpa [#allocation4], 1
    %s345 = scalar_lea.sflag [#allocation4], 1
    %346 = vsyncpa %s345, 1

</llo_original>
